<compile_context>
chip_gen: v7x
topology: tpu7x:2x2x1
jax: 0.10.0
libtpu: 0.0.40
codegen_flags: <defaults>
</compile_context>

<pallas_src>
import jax
import jax.numpy as jnp
from jax.experimental import pallas as pl
from jax.experimental.pallas import tpu as pltpu


def _cdiv(a, b):
    return -(-a // b)


def _round_up(a, b):
    return _cdiv(a, b) * b


def _gc4d_kernel(adj_ref, x_ref, o_ref):
    # adj_ref: (TV, TV) pre-masked adjacency, resident in VMEM across the grid.
    # x_ref / o_ref: (Nb, TV, Cc) blocks in the native (N, TV, C) layout.
    adj = adj_ref[...]
    for i in range(x_ref.shape[0]):                       # static Nb unroll
        xi = x_ref[i].astype(adj.dtype)                   # f32 -> bf16 cast in-kernel (free)
        acc = jnp.dot(adj, xi, preferred_element_type=jnp.float32)
        o_ref[i] = acc.astype(o_ref.dtype)


def _gc4d_kernel_bias(adj_ref, x_ref, b_ref, o_ref):
    adj = adj_ref[...]
    b = b_ref[...]                                        # (1, Cc) f32, broadcasts over rows
    for i in range(x_ref.shape[0]):
        xi = x_ref[i].astype(adj.dtype)
        acc = jnp.dot(adj, xi, preferred_element_type=jnp.float32) + b
        o_ref[i] = acc.astype(o_ref.dtype)


def make_static_masks(frame_n, node_n):
    # Compact forms of the module's static buffers:
    #   pose[t, i] = 0 where t == i ; traj[v, j] = 0 where v == j
    pose = (jnp.arange(frame_n)[:, None] != jnp.arange(frame_n)[None, :]).astype(jnp.float32)
    traj = (jnp.arange(node_n)[:, None] != jnp.arange(node_n)[None, :]).astype(jnp.float32)
    return pose, traj


def gc4d_skip_forward(adj, adj_mask, x, bias=None, *, use_bf16=True,
                      out_dtype=jnp.float32):
    """
    adj      : (T, V, T, V)  learnable adjacency
    adj_mask : (T, V, V)     runtime mask (broadcast over the 'i' frame dim)
    x        : (N, T, V, C)
    bias     : (C,) or None
    returns  : (N, T, V, C)  in out_dtype (f32 default; bf16 halves writeback)
    """
    T, V = adj.shape[0], adj.shape[1]
    N, _, _, C = x.shape
    TV = T * V

    # --- fold all masks into the adjacency once (tiny TV^2 op) ---------------
    pose, traj = make_static_masks(T, V)
    mask4 = (adj_mask[:, :, None, :]
             * pose[:, None, :, None]
             * traj[None, :, None, :])                                   # (T,V,T,V)
    adj_dtype = jnp.bfloat16 if use_bf16 else jnp.float32
    adj2 = (adj.astype(jnp.float32) * mask4).reshape(TV, TV).astype(adj_dtype)

    # --- activation stays in its native layout & dtype (no HBM passes) -------
    x3 = x.reshape(N, TV, C)                                             # free reshape

    # --- channel chunking: full C when it fits, balanced 128-multiples else --
    c_cap = 1024
    if C <= c_cap:
        Cc = C
    else:
        Cc = _round_up(_cdiv(C, _cdiv(C, c_cap)), 128)   # minimizes last-chunk waste
    n_c = _cdiv(C, Cc)

    # --- batch block: fatter steps (amortize per-step overhead), but keep the
    #     VMEM footprint small and >=2 grid steps for v7x's two TensorCores ----
    x_item = x3.dtype.itemsize
    o_item = jnp.dtype(out_dtype).itemsize
    blk_budget = 4 << 20                                  # x+out block bytes per step
    Nb = 1
    for nb in range(1, min(N, 8) + 1):
        if N % nb:
            continue
        if nb * TV * Cc * (x_item + o_item) > blk_budget:
            continue
        if (N // nb) * n_c < 2 and N * n_c > 1:
            continue                                      # keep both v7x cores busy
        Nb = nb
    grid = (N // Nb, n_c)

    # --- specs ----------------------------------------------------------------
    adj_bytes = TV * TV * adj2.dtype.itemsize
    if adj_bytes > (4 << 20):
        # Large adjacency: constant block index never needs a prefetched "next"
        # block, so keep a single VMEM copy instead of the default double buffer.
        adj_spec = pl.BlockSpec((TV, TV), lambda n, j: (0, 0),
                                pipeline_mode=pl.Buffered(1))
        adj_resident_bytes = adj_bytes
    else:
        adj_spec = pl.BlockSpec((TV, TV), lambda n, j: (0, 0))
        adj_resident_bytes = 2 * adj_bytes
    # NOTE: if TV ever grows so large that adj alone nears the scoped-VMEM limit
    # (~TV>2500 bf16 on v7x's 32 MiB default), add an "arbitrary" K-tiling grid
    # axis with a VMEM f32 accumulator (pl.when init/finalize).

    x_spec = pl.BlockSpec((Nb, TV, Cc), lambda n, j: (n, 0, j))
    out_spec = pl.BlockSpec((Nb, TV, Cc), lambda n, j: (n, 0, j))
    out_shape = jax.ShapeDtypeStruct((N, TV, C), out_dtype)

    # --- compiler params: only raise the VMEM limit when actually needed ------
    vmem_need = (adj_resident_bytes
                 + 2 * Nb * TV * Cc * x_item              # double-buffered x
                 + 2 * Nb * TV * Cc * o_item              # double-buffered out
                 + 2 * Cc * 4)                            # bias
    cp_kwargs = dict(dimension_semantics=("parallel", "parallel"))
    if vmem_need > (12 << 20):                            # v5e scoped default is 16 MiB
        cp_kwargs["vmem_limit_bytes"] = int(min(vmem_need * 2, 56 << 20))
    cparams = pltpu.CompilerParams(**cp_kwargs)

    cost = pl.CostEstimate(
        flops=2 * N * TV * TV * C,
        transcendentals=0,
        bytes_accessed=(x_item * N * TV * C + o_item * N * TV * C
                        + adj2.dtype.itemsize * TV * TV),
    )

    if bias is not None:
        bias2 = bias.astype(jnp.float32).reshape(1, C)
        out3 = pl.pallas_call(
            _gc4d_kernel_bias,
            out_shape=out_shape,
            grid=grid,
            in_specs=[adj_spec, x_spec,
                      pl.BlockSpec((1, Cc), lambda n, j: (0, j))],
            out_specs=out_spec,
            compiler_params=cparams,
            cost_estimate=cost,
        )(adj2, x3, bias2)
    else:
        out3 = pl.pallas_call(
            _gc4d_kernel,
            out_shape=out_shape,
            grid=grid,
            in_specs=[adj_spec, x_spec],
            out_specs=out_spec,
            compiler_params=cparams,
            cost_estimate=cost,
        )(adj2, x3)

    return out3.reshape(N, T, V, C)                       # free reshape


if __name__ == "__main__":
    key = jax.random.PRNGKey(0)

    def run_case(batch, frame_n, node_n, channels, with_bias, case_key,
                 out_dtype=jnp.float32):
        k_adj, k_x, k_mask, k_b = jax.random.split(case_key, 4)
        # NOTE: PyTorch __init__ zero-inits adj (learned parameter); use random
        # values here so the output is non-trivial to verify.
        adj = jax.random.normal(k_adj, (frame_n, node_n, frame_n, node_n), jnp.float32)
        x = jax.random.normal(k_x, (batch, frame_n, node_n, channels), jnp.float32)
        adj_mask = (jax.random.uniform(k_mask, (frame_n, node_n, node_n)) > 0.3
                    ).astype(jnp.float32)
        bias = (jax.random.uniform(k_b, (channels,), jnp.float32) - 0.5) if with_bias else None

        out = jax.block_until_ready(
            gc4d_skip_forward(adj, adj_mask, x, bias, out_dtype=out_dtype))

        # Pure-JAX references (mirror the PyTorch forward exactly).
        pose, traj = make_static_masks(frame_n, node_n)
        mask4 = adj_mask[:, :, None, :] * pose[:, None, :, None] * traj[None, :, None, :]
        masked_adj = adj * mask4
        hp = jax.lax.Precision.HIGHEST
        ref_f32 = jnp.einsum('tvij,nijc->ntvc', masked_adj, x, precision=hp)
        ref_bf16 = jnp.einsum('tvij,nijc->ntvc',
                              masked_adj.astype(jnp.bfloat16).astype(jnp.float32),
                              x.astype(jnp.bfloat16).astype(jnp.float32),
                              precision=hp)
        if bias is not None:
            ref_f32 = ref_f32 + bias
            ref_bf16 = ref_bf16 + bias

        assert out.shape == (batch, frame_n, node_n, channels)
        assert out.dtype == out_dtype
        out32 = out.astype(jnp.float32)
        # Tight check vs a reference built from identically bf16-quantized inputs.
        if out_dtype == jnp.float32:
            assert jnp.allclose(out32, ref_bf16, atol=2e-3, rtol=2e-3), "mismatch vs bf16-input ref"
        else:  # bf16 output adds one more rounding step
            assert jnp.allclose(out32, ref_bf16, atol=6e-2, rtol=2e-2), "mismatch vs bf16-input ref"
        # Loose sanity check vs the full-f32 reference (bounds bf16 rounding error).
        assert jnp.allclose(out32, ref_f32, atol=2.5e-1, rtol=5e-2), "mismatch vs f32 ref"

    k1, k2, k3 = jax.random.split(key, 3)
    # Case 1: small shapes, fused bias, Nb=1 (grid has 2 steps over N).
    run_case(batch=2, frame_n=8, node_n=6, channels=16, with_bias=True, case_key=k1)
    # Case 2: larger batch/channels -> Nb=4 exercises the in-kernel batch loop.
    run_case(batch=8, frame_n=8, node_n=6, channels=128, with_bias=False, case_key=k2)
    # Case 3: non-8-aligned TV (like the real module's T*V=770) + bf16 output path.
    run_case(batch=3, frame_n=7, node_n=5, channels=24, with_bias=True, case_key=k3,
             out_dtype=jnp.bfloat16)

    print("KERNEL_OK")
</pallas_src>

<mosaic_0001>
module attributes {stable_mosaic.version = 11 : i64} {
  func.func @_gc4d_kernel_bias(%arg0: i32, %arg1: i32, %arg2: memref<48x48xbf16, #tpu.memory_space<vmem>>, %arg3: memref<1x48x16xf32, #tpu.memory_space<vmem>>, %arg4: memref<1x16xf32, #tpu.memory_space<vmem>>, %arg5: memref<1x48x16xf32, #tpu.memory_space<vmem>>) attributes {dimension_semantics = [#tpu.dimension_semantics<parallel>, #tpu.dimension_semantics<parallel>], iteration_bounds = array<i64: 2, 1>, scalar_prefetch = 0 : i64, scratch_operands = 0 : i64, tpu.core_type = #tpu.core_type<tc>, window_params = [{pipeline_mode = #tpu.pipeline_mode<synchronous>, transform_indices = @transform_0, window_bounds = array<i64: 48, 48>}, {transform_indices = @transform_1, window_bounds = array<i64: 1, 48, 16>}, {transform_indices = @transform_2, window_bounds = array<i64: 1, 16>}, {transform_indices = @transform_3, window_bounds = array<i64: 1, 48, 16>}]} {
    %c0 = arith.constant 0 : index
    %c0_0 = arith.constant 0 : index
    %0 = vector.load %arg2[%c0, %c0_0] : memref<48x48xbf16, #tpu.memory_space<vmem>>, vector<48x48xbf16>
    %c0_1 = arith.constant 0 : index
    %c0_2 = arith.constant 0 : index
    %1 = vector.load %arg4[%c0_1, %c0_2] : memref<1x16xf32, #tpu.memory_space<vmem>>, vector<1x16xf32>
    %c0_3 = arith.constant 0 : index
    %c0_4 = arith.constant 0 : index
    %c0_5 = arith.constant 0 : index
    %2 = vector.load %arg3[%c0_3, %c0_4, %c0_5] : memref<1x48x16xf32, #tpu.memory_space<vmem>>, vector<1x48x16xf32>
    %3 = vector.shape_cast %2 : vector<1x48x16xf32> to vector<48x16xf32>
    %4 = arith.truncf %3 : vector<48x16xf32> to vector<48x16xbf16>
    %cst = arith.constant dense<0.000000e+00> : vector<48x16xf32>
    %5 = tpu.matmul %0, %4, %cst {dimension_numbers = #tpu.dot_dimension_numbers<[1], [0], [0], [1], [0, 0, 1, 1], [], []>} : vector<48x48xbf16>, vector<48x16xbf16>, vector<48x16xf32> -> vector<48x16xf32>
    %6 = vector.broadcast %1 : vector<1x16xf32> to vector<48x16xf32>
    %7 = arith.addf %5, %6 : vector<48x16xf32>
    %c0_6 = arith.constant 0 : index
    %c0_7 = arith.constant 0 : index
    %c0_8 = arith.constant 0 : index
    %8 = vector.load %arg5[%c0_6, %c0_7, %c0_8] : memref<1x48x16xf32, #tpu.memory_space<vmem>>, vector<1x48x16xf32>
    %9 = vector.shape_cast %8 : vector<1x48x16xf32> to vector<48x16xf32>
    %10 = vector.shape_cast %7 : vector<48x16xf32> to vector<1x48x16xf32>
    tpu.vector_store %arg5[%c0_6, %c0_7, %c0_8], %10 {strides = array<i32>} : memref<1x48x16xf32, #tpu.memory_space<vmem>>, vector<1x48x16xf32>,
    return
  }
  func.func @transform_0(%arg0: i32, %arg1: i32) -> (i32, i32) {
    %c0_i32 = arith.constant 0 : i32
    %c0_i32_0 = arith.constant 0 : i32
    %c0_i32_1 = arith.constant 0 : i32
    return %c0_i32, %c0_i32_0 : i32, i32
  }
  func.func @transform_1(%arg0: i32, %arg1: i32) -> (i32, i32, i32) {
    %c0_i32 = arith.constant 0 : i32
    %c0_i32_0 = arith.constant 0 : i32
    return %arg0, %c0_i32, %arg1 : i32, i32, i32
  }
  func.func @transform_2(%arg0: i32, %arg1: i32) -> (i32, i32) {
    %c0_i32 = arith.constant 0 : i32
    %c0_i32_0 = arith.constant 0 : i32
    return %c0_i32, %arg1 : i32, i32
  }
  func.func @transform_3(%arg0: i32, %arg1: i32) -> (i32, i32, i32) {
    %c0_i32 = arith.constant 0 : i32
    %c0_i32_0 = arith.constant 0 : i32
    return %arg0, %c0_i32, %arg1 : i32, i32, i32
  }
}

</mosaic_0001>

<llo_original>
// kernel: tpu_custom_call.1
$region0: #{tpu_custom_call.1}
  #allocation0 [shape = 'u32[]', space=smem, size = 0x4, offset = 0x4, fixed_abs, tag = 'smem constant byte address 0x4 - core index']
  #allocation1 [shape = 'u32[144,128]{1,0:T(1,128)}', space=vmem, size = 0x12000, scoped, tag = 'internal scratch']
  %s0 = inlined_call_operand.vmem [shape: bf16[48,48], index: 0, kind: input, shape index: {}]
  %s1 = inlined_call_operand.vmem [shape: f32[2,48,16], index: 1, kind: input, shape index: {}]
  %s2 = inlined_call_operand.vmem [shape: f32[1,16], index: 2, kind: input, shape index: {}]
  %s3 = inlined_call_operand.vmem [shape: f32[2,48,16], index: 3, kind: output, shape index: {}]
  %s4 = sld [smem:[#allocation0]]
  $region45: #{tpu_custom_call.1} parent=0
    _
  %s6 = ssub.s32 1, %s4
  %s7 = scalar_select 0, %s6, %s4
  loop: start=0, step=1, limit=4
  $region2: #{tpu_custom_call.1} parent=0 // loop_pre_header
    _
  $region3: #{tpu_custom_call.1} parent=0 // loop_header
    %s9 = sphi 0, %s13
    %p10 = scmp.ge.s32.totalorder %s9, 4
    %s16 = sphi 0, %s28
    %s17 = sphi 0, %s24
    %s18 = sphi 0, %s16
    %s19 = sphi 0, %s17
    %s20 = sphi 0, %s18
    %s21 = sphi 0, %s19
    %s29 = sphi 0, %s29
    %s31 = sphi 0, %s29
    %s32 = sphi 0, %s31
    %s46 = sphi 0, %s32
    %s54 = sphi 0, %s56
    %s57 = sphi 0, %s54
    %s58 = sphi 0, %s57
    %s74 = sphi 0, %s58
    %s80 = sphi 0, %s82
    %s83 = sphi 0, %s80
    %s84 = sphi 0, %s83
    %s100 = sphi 0, %s84
    %s108 = sphi 0, %s110
    %s111 = sphi 0, %s108
    %s112 = sphi 0, %s111
    %s128 = sphi 0, %s112
  $region4: #{tpu_custom_call.1} parent=0 // loop_header_branch
    %12 = sbr.rel (%p10) target = $region8
  $region5: #{tpu_custom_call.1} parent=0 // loop_body
    %s14 = ssub.s32 %s9, 1
    %s15 = ssub.s32 %s9, 2
    %s22 = sadd.s32 1, %s17
    %p23 = scmp.ge.s32.totalorder %s22, 1
    %s24 = scalar_select %p23, 0, %s22
    %s25 = sadd.s32 1, %s16
    %s26 = scalar_select %p23, %s25, %s16
    %p27 = scmp.ge.s32.totalorder %s26, 2
    %s28 = scalar_select %p27, 0, %s26
    %s30 = sadd.s32 %s29, 1
    %p33 = scmp.eq.s32.totalorder %s9, 1
    %p34 = scmp.ne.s32.totalorder %s29, %s31
    %p35 = scmp.eq.s32.totalorder %s9, 0
    %p36 = por %p34, %p35
    %p37 = scmp.ne.s32.totalorder %s29, %s31
    %p38 = scmp.eq.s32.totalorder %s14, 1
    %p39 = por %p37, %p38
    %p40 = scmp.ne.s32.totalorder %s31, %s32
    %p41 = scmp.eq.s32.totalorder %s14, 0
    %p42 = por %p40, %p41
    %p43 = scmp.ne.s32.totalorder %s31, %s32
    %p44 = scmp.eq.s32.totalorder %s15, 1
    %p45 = por %p43, %p44
    %p47 = scmp.ne.s32.totalorder %s32, %s46
    %p48 = scmp.eq.s32.totalorder %s15, 0
    %p49 = por %p47, %p48
    %s50 = ssub.s32 %s16, %s28
    %s51 = ssub.s32 %s17, %s24
    %s52 = sor.u32 %s50, %s51
    %p53 = scmp.eq.s32.totalorder %s52, 0
    %s55 = sadd.s32 %s54, 1
    %s56 = scalar_select %p53, %s54, %s55
    %p59 = pneg %p53
    %p60 = scmp.eq.s32.totalorder %s9, 1
    %p61 = por %p59, %p60
    %p62 = scmp.ne.s32.totalorder %s54, %s57
    %p63 = scmp.eq.s32.totalorder %s9, 0
    %p64 = por %p62, %p63
    %p65 = scmp.ne.s32.totalorder %s54, %s57
    %p66 = scmp.eq.s32.totalorder %s14, 1
    %p67 = por %p65, %p66
    %p68 = scmp.ne.s32.totalorder %s57, %s58
    %p69 = scmp.eq.s32.totalorder %s14, 0
    %p70 = por %p68, %p69
    %p71 = scmp.ne.s32.totalorder %s57, %s58
    %p72 = scmp.eq.s32.totalorder %s15, 1
    %p73 = por %p71, %p72
    %p75 = scmp.ne.s32.totalorder %s58, %s74
    %p76 = scmp.eq.s32.totalorder %s15, 0
    %p77 = por %p75, %p76
    %s78 = ssub.s32 %s17, %s24
    %p79 = scmp.eq.s32.totalorder %s78, 0
    %s81 = sadd.s32 %s80, 1
    %s82 = scalar_select %p79, %s80, %s81
    %p85 = pneg %p79
    %p86 = scmp.eq.s32.totalorder %s9, 1
    %p87 = por %p85, %p86
    %p88 = scmp.ne.s32.totalorder %s80, %s83
    %p89 = scmp.eq.s32.totalorder %s9, 0
    %p90 = por %p88, %p89
    %p91 = scmp.ne.s32.totalorder %s80, %s83
    %p92 = scmp.eq.s32.totalorder %s14, 1
    %p93 = por %p91, %p92
    %p94 = scmp.ne.s32.totalorder %s83, %s84
    %p95 = scmp.eq.s32.totalorder %s14, 0
    %p96 = por %p94, %p95
    %p97 = scmp.ne.s32.totalorder %s83, %s84
    %p98 = scmp.eq.s32.totalorder %s15, 1
    %p99 = por %p97, %p98
    %p101 = scmp.ne.s32.totalorder %s84, %s100
    %p102 = scmp.eq.s32.totalorder %s15, 0
    %p103 = por %p101, %p102
    %s104 = ssub.s32 %s16, %s28
    %s105 = ssub.s32 %s17, %s24
    %s106 = sor.u32 %s104, %s105
    %p107 = scmp.eq.s32.totalorder %s106, 0
    %s109 = sadd.s32 %s108, 1
    %s110 = scalar_select %p107, %s108, %s109
    %p113 = pneg %p107
    %p114 = scmp.eq.s32.totalorder %s9, 1
    %p115 = por %p113, %p114
    %p116 = scmp.ne.s32.totalorder %s108, %s111
    %p117 = scmp.eq.s32.totalorder %s9, 0
    %p118 = por %p116, %p117
    %p119 = scmp.ne.s32.totalorder %s108, %s111
    %p120 = scmp.eq.s32.totalorder %s14, 1
    %p121 = por %p119, %p120
    %p122 = scmp.ne.s32.totalorder %s111, %s112
    %p123 = scmp.eq.s32.totalorder %s14, 0
    %p124 = por %p122, %p123
    %p125 = scmp.ne.s32.totalorder %s111, %s112
    %p126 = scmp.eq.s32.totalorder %s15, 1
    %p127 = por %p125, %p126
    %p129 = scmp.ne.s32.totalorder %s112, %s128
    %p130 = scmp.eq.s32.totalorder %s15, 0
    %p131 = por %p129, %p130
    %p132 = scmp.le.s32.totalorder 1, %s9
    %p133 = scmp.lt.s32.totalorder %s9, 3
    %p134 = pnand %p132, %p133
    %p135 = pneg %p134
    // Predicated region
    $region9: #{tpu_custom_call.1} parent=5 // pred_check
      _
    $region10: #{tpu_custom_call.1} parent=5 // pred_check_branch
      %137 = sbr.rel (%p134) target = $region12
    $region11: #{tpu_custom_call.1} parent=5 // pred_region
      %s138 = ssub.s32 %s9, 1
      // Predicated region
      $region13: #{tpu_custom_call.1} parent=11 // pred_check
        %p139 = pneg %p42
      $region14: #{tpu_custom_call.1} parent=11 // pred_check_branch
        %141 = sbr.rel (%p139) target = $region16
      $region15: #{tpu_custom_call.1} parent=11 // pred_region
        _
      $region16: #{tpu_custom_call.1} parent=11 // pred_fallthru
        _
      // Predicated region
      $region17: #{tpu_custom_call.1} parent=11 // pred_check
        %p142 = pneg %p96
      $region18: #{tpu_custom_call.1} parent=11 // pred_check_branch
        %144 = sbr.rel (%p142) target = $region20
      $region19: #{tpu_custom_call.1} parent=11 // pred_region
        %p145 = scmp.lt.s32.totalorder %s19, 0
        %s146 = scalar_select %p145, %s19, 0
        %s147 = scalar_lea.vmem %s2, %s146
      $region20: #{tpu_custom_call.1} parent=11 // pred_fallthru
        _
    $region12: #{tpu_custom_call.1} parent=5 // pred_fallthru
      _
    %p148 = scmp.lt.s32.totalorder %s9, 2
    // Predicated region
    $region21: #{tpu_custom_call.1} parent=5 // pred_check
      %p149 = pneg %p148
    $region22: #{tpu_custom_call.1} parent=5 // pred_check_branch
      %151 = sbr.rel (%p149) target = $region24
    $region23: #{tpu_custom_call.1} parent=5 // pred_region
      // Predicated region
      $region25: #{tpu_custom_call.1} parent=23 // pred_check
        %p152 = pneg %p64
      $region26: #{tpu_custom_call.1} parent=23 // pred_check_branch
        %154 = sbr.rel (%p152) target = $region28
      $region27: #{tpu_custom_call.1} parent=23 // pred_region
        %p155 = scmp.lt.s32.totalorder %s16, 1
        %s156 = scalar_select %p155, %s16, 1
        %p157 = scmp.lt.s32.totalorder %s17, 0
        %s158 = scalar_select %p157, %s17, 0
        %s159 = smul.addr %s156, 6
        %s160 = sadd.s32 %s158, %s159
        %s161 = smul.addr %s160, 8
        %s162 = scalar_lea.vmem %s1, %s161
      $region28: #{tpu_custom_call.1} parent=23 // pred_fallthru
        _
    $region24: #{tpu_custom_call.1} parent=5 // pred_fallthru
      _
    %p163 = scmp.le.s32.totalorder 1, %s9
    %p164 = scmp.lt.s32.totalorder %s9, 3
    %p165 = pnand %p163, %p164
    %p166 = pneg %p165
    // Predicated region
    $region29: #{tpu_custom_call.1} parent=5 // pred_check
      _
    $region30: #{tpu_custom_call.1} parent=5 // pred_check_branch
      %168 = sbr.rel (%p165) target = $region32
    $region31: #{tpu_custom_call.1} parent=5 // pred_region
      %s169 = ssub.s32 %s9, 1
      %p170 = pneg %p42
      %p171 = pneg %p39
      %p172 = scmp.lt.s32.totalorder %s18, 1
      %s173 = scalar_select %p172, %s18, 1
      %p174 = scmp.lt.s32.totalorder %s19, 0
      %s175 = scalar_select %p174, %s19, 0
      %s176 = smul.addr %s173, 6
      %s177 = sadd.s32 %s175, %s176
      %s178 = smul.addr %s177, 8
      %s179 = scalar_lea.vmem %s1, %s178
      %p180 = pneg %p70
      %p181 = pneg %p67
      %p182 = scmp.lt.s32.totalorder %s19, 0
      %s183 = scalar_select %p182, %s19, 0
      %s184 = scalar_lea.vmem %s2, %s183
      %p185 = pneg %p96
      %p186 = pneg %p93
      %p187 = pneg %p124
      %p188 = pneg %p121
      %p189 = scmp.lt.s32.totalorder %s18, 1
      %s190 = scalar_select %p189, %s18, 1
      %p191 = scmp.lt.s32.totalorder %s19, 0
      %s192 = scalar_select %p191, %s19, 0
      %s193 = smul.addr %s190, 6
      %s194 = sadd.s32 %s192, %s193
      %s195 = smul.addr %s194, 8
      %s196 = scalar_lea.vmem %s3, %s195
      %p197 = scmp.lt.s32.totalorder %s18, 1
      %s198 = scalar_select %p197, %s18, 1
      %p199 = scmp.lt.s32.totalorder %s19, 0
      %s200 = scalar_select %p199, %s19, 0
      %s201 = smul.addr %s198, 6
      %s202 = sadd.s32 %s200, %s201
      %s203 = smul.addr %s202, 8
      %s204 = scalar_lea.vmem %s1, %s203
      %p205 = scmp.lt.s32.totalorder %s19, 0
      %s206 = scalar_select %p205, %s19, 0
      %s207 = scalar_lea.vmem %s2, %s206
      %p208 = scmp.lt.s32.totalorder %s18, 1
      %s209 = scalar_select %p208, %s18, 1
      %p210 = scmp.lt.s32.totalorder %s19, 0
      %s211 = scalar_select %p210, %s19, 0
      %s212 = smul.addr %s209, 6
      %s213 = sadd.s32 %s211, %s212
      %s214 = smul.addr %s213, 8
      %s215 = scalar_lea.vmem %s3, %s214
      %v217 = vld [vmem:[%s0] sm:$0xf]
      %v218 = vld [vmem:[%s0 + $0x4] sm:$0xf]
      %v219 = vld [vmem:[%s0 + $0x8] sm:$0xf]
      %v220 = vld [vmem:[%s0 + $0xc] sm:$0xf]
      %v221 = vld [vmem:[%s0 + $0x10] sm:$0xf]
      %v222 = vld [vmem:[%s0 + $0x14] sm:$0xf]
      %v223 = vld [vmem:[%s207] sm:$0x1]
      %v224 = vld [vmem:[%s204] sm:$0xff]
      %v225 = vld [vmem:[%s204 + $0x8] sm:$0xff]
      %v226 = vld [vmem:[%s204 + $0x10] sm:$0xff]
      %v227 = vld [vmem:[%s204 + $0x18] sm:$0xff]
      %v228 = vld [vmem:[%s204 + $0x20] sm:$0xff]
      %v229 = vld [vmem:[%s204 + $0x28] sm:$0xff]
      %v230 = vpack.c.bf16 %v225, %v224
      %v231 = vpack.c.bf16 %v227, %v226
      %v232 = vpack.c.bf16 %v229, %v228
      %v234 = vlaneseq
      %v235 = vshrl.u32 %v234, 7
      %v236 = vsub.s32 0, %v235
      %v237 = vrot.slane %v223, %v236
      %v245 = vunpack.c.l.b16 %v217
      %v246 = vunpack.c.l.b16 %v218
      %v247 = vunpack.c.l.b16 %v219
      %v248 = vunpack.c.l.b16 %v220
      %v249 = vunpack.c.l.b16 %v221
      %v250 = vunpack.c.l.b16 %v222
      %v251 = vpack.c.b16 %v246, %v245
      %v252 = vpack.c.b16 %v248, %v247
      %v253 = vpack.c.b16 %v250, %v249
      %vm254 = vcmask 392192
      %v256 = vsel %vm254, %v251, 0
      %v259 = vsel %vm254, %v252, 0
      %v262 = vsel %vm254, %v253, 0
      %264 = vmatprep.subr.bf16.mxu0 0
      %265 = vmatpush1.bf16.msra.mxu0 %v230
      %266 = vmatprep.subr.bf16.mxu0 0
      %267 = vmatpush1.bf16.msra.mxu0 %v231
      %268 = vmatprep.subr.bf16.mxu0 0
      %269 = vmatpush1.bf16.msra.mxu0 %v232
      %270 = vmatprep.subr.bf16.mxu0 0
      %271 = vmatpush1.bf16.msra.mxu0 0
      %272 = vmatprep.subr.bf16.mxu0 0
      %273 = vmatpush1.bf16.msra.mxu0 0
      %274 = vmatprep.subr.bf16.mxu0 0
      %275 = vmatpush1.bf16.msra.mxu0 0
      %276 = vmatprep.subr.bf16.mxu0 0
      %277 = vmatpush1.bf16.msra.mxu0 0
      %278 = vmatprep.subr.bf16.mxu0 0
      %279 = vmatpush1.bf16.msra.mxu0 0
      %280 = vmatprep.subr.bf16.mxu0 0
      %281 = vmatpush1.bf16.msra.mxu0 0
      %282 = vmatprep.subr.bf16.mxu0 0
      %283 = vmatpush1.bf16.msra.mxu0 0
      %284 = vmatprep.subr.bf16.mxu0 0
      %285 = vmatpush1.bf16.msra.mxu0 0
      %286 = vmatprep.subr.bf16.mxu0 0
      %287 = vmatpush1.bf16.msra.mxu0 0
      %288 = vmatprep.subr.bf16.mxu0 0
      %289 = vmatpush1.bf16.msra.mxu0 0
      %290 = vmatprep.subr.bf16.mxu0 0
      %291 = vmatpush1.bf16.msra.mxu0 0
      %292 = vmatprep.subr.bf16.mxu0 0
      %293 = vmatpush1.bf16.msra.mxu0 0
      %294 = vmatprep.subr.bf16.mxu0 0
      %295 = vmatpush1.bf16.msra.mxu0 0
      %296 = vmatprep.mubr.bf16.mxu0 0
      %297 = vmatmul.mubr.bf16.gmra.mrb[0].mxu0 %v256
      %v298 = vpop.f32.mrb[0].mxu0
      %v299 = vadd.f32 %v237, %v298
      %v300 = vpop.f32.mrb[0].mxu0
      %v301 = vpop.f32.mrb[0].mxu0
      %v302 = vadd.f32 %v237, %v301
      %v303 = vpop.f32.mrb[0].mxu0
      %304 = vmatprep.mubr.bf16.mxu0 0
      %305 = vmatmul.mubr.bf16.gmra.mrb[0].mxu0 %v259
      %v306 = vpop.f32.mrb[0].mxu0
      %v307 = vadd.f32 %v237, %v306
      %v308 = vpop.f32.mrb[0].mxu0
      %v309 = vpop.f32.mrb[0].mxu0
      %v310 = vadd.f32 %v237, %v309
      %v311 = vpop.f32.mrb[0].mxu0
      %312 = vmatprep.mubr.bf16.mxu0 0
      %313 = vmatmul.mubr.bf16.gmra.mrb[0].mxu0 %v262
      %v314 = vpop.f32.mrb[0].mxu0
      %v315 = vadd.f32 %v237, %v314
      %v316 = vpop.f32.mrb[0].mxu0
      %v317 = vpop.f32.mrb[0].mxu0
      %v318 = vadd.f32 %v237, %v317
      %v319 = vpop.f32.mrb[0].mxu0
      %320 = vdwg.mxu0
      %vm321 = vcmask 130048
      %322 = vst.msk [vmem:[%s215] sm:$0xff] %vm321, %v299
      %323 = vst.msk [vmem:[%s215 + $0x8] sm:$0xff] %vm321, %v302
      %324 = vst.msk [vmem:[%s215 + $0x10] sm:$0xff] %vm321, %v307
      %325 = vst.msk [vmem:[%s215 + $0x18] sm:$0xff] %vm321, %v310
      %326 = vst.msk [vmem:[%s215 + $0x20] sm:$0xff] %vm321, %v315
      %327 = vst.msk [vmem:[%s215 + $0x28] sm:$0xff] %vm321, %v318
      %p328 = scmp.lt.s32.totalorder %s18, 1
      %s329 = scalar_select %p328, %s18, 1
      %p330 = scmp.lt.s32.totalorder %s19, 0
      %s331 = scalar_select %p330, %s19, 0
      %s332 = smul.addr %s329, 6
      %s333 = sadd.s32 %s331, %s332
      %s334 = smul.addr %s333, 8
      %s335 = scalar_lea.vmem %s3, %s334
      // Predicated region
      $region33: #{tpu_custom_call.1} parent=31 // pred_check
        %p336 = pneg %p121
      $region34: #{tpu_custom_call.1} parent=31 // pred_check_branch
        %338 = sbr.rel (%p336) target = $region36
      $region35: #{tpu_custom_call.1} parent=31 // pred_region
        _
      $region36: #{tpu_custom_call.1} parent=31 // pred_fallthru
        _
    $region32: #{tpu_custom_call.1} parent=5 // pred_fallthru
      _
    %p339 = scmp.le.s32.totalorder 2, %s9
    // Predicated region
    $region37: #{tpu_custom_call.1} parent=5 // pred_check
      %p340 = pneg %p339
    $region38: #{tpu_custom_call.1} parent=5 // pred_check_branch
      %342 = sbr.rel (%p340) target = $region40
    $region39: #{tpu_custom_call.1} parent=5 // pred_region
      %s343 = ssub.s32 %s9, 2
      // Predicated region
      $region41: #{tpu_custom_call.1} parent=39 // pred_check
        %p344 = pneg %p127
      $region42: #{tpu_custom_call.1} parent=39 // pred_check_branch
        %346 = sbr.rel (%p344) target = $region44
      $region43: #{tpu_custom_call.1} parent=39 // pred_region
        %p347 = scmp.lt.s32.totalorder %s20, 1
        %s348 = scalar_select %p347, %s20, 1
        %p349 = scmp.lt.s32.totalorder %s21, 0
        %s350 = scalar_select %p349, %s21, 0
        %s351 = smul.addr %s348, 6
        %s352 = sadd.s32 %s350, %s351
        %s353 = smul.addr %s352, 8
        %s354 = scalar_lea.vmem %s3, %s353
      $region44: #{tpu_custom_call.1} parent=39 // pred_fallthru
        _
    $region40: #{tpu_custom_call.1} parent=5 // pred_fallthru
      _
  $region6: #{tpu_custom_call.1} parent=0 // loop_footer
    %s13 = sadd.s32 1, %s9
  $region7: #{tpu_custom_call.1} parent=0 // loop_footer_branch
    %8 = sbr.rel target = $region3
  $region8: #{tpu_custom_call.1} parent=0 // loop_exit
    _

</llo_original>
